<compile_context>
chip_gen: v7x
topology: tpu7x:2x2x1
jax: 0.10.0
libtpu: 0.0.40
codegen_flags: <defaults>
</compile_context>

<pallas_src>
import numpy as np
import jax
import jax.numpy as jnp
from jax.experimental import pallas as pl
from jax.experimental.pallas import tpu as pltpu


# ----------------------------- init-time glue (plain numpy) -----------------------------

def split_feature_channel_last_np(feature, num_splits=2):
    # mirrors split_feature(..., channel_last=True) from the torch code
    b, h, w, c = feature.shape
    assert h % num_splits == 0 and w % num_splits == 0
    feature = feature.reshape(b, num_splits, h // num_splits, num_splits, w // num_splits, c)
    feature = feature.transpose(0, 1, 3, 2, 4, 5)
    return feature.reshape(b * num_splits * num_splits, h // num_splits, w // num_splits, c)


def build_mask_windows_np(input_resolution, attn_splits):
    h, w = input_resolution
    window_size_h = h // attn_splits
    window_size_w = w // attn_splits
    shift_size_h = window_size_h // 2
    shift_size_w = window_size_w // 2

    img_mask = np.zeros((1, h, w, 1), dtype=np.float32)
    h_slices = (slice(0, -window_size_h),
                slice(-window_size_h, -shift_size_h),
                slice(-shift_size_h, None))
    w_slices = (slice(0, -window_size_w),
                slice(-window_size_w, -shift_size_w),
                slice(-shift_size_w, None))
    cnt = 0
    for hs in h_slices:
        for ws in w_slices:
            img_mask[:, hs, ws, :] = cnt
            cnt += 1

    mask_windows = split_feature_channel_last_np(img_mask, num_splits=attn_splits)
    return mask_windows.reshape(-1, window_size_h * window_size_w)  # (nW, L)


# ----------------------------- Pallas kernel -----------------------------

def _attn_mask_kernel(row_ref, col_ref, o_ref):
    # row_ref: (tr, nW*L) window-id of query position i (pre-"transposed" on host)
    # col_ref: (1,  nW*L) window-id of key position j (broadcasts along sublanes)
    # Pure VPU compare + select; no XLU transpose, no subtract; lane-dense stores.
    o_ref[...] = jnp.where(row_ref[...] != col_ref[...],
                           jnp.float32(-100.0), jnp.float32(0.0))


_F32_BYTES = 4
_VMEM_BUDGET_BYTES = 16 << 20  # conservative vs v5e/v6e/v7x scoped-VMEM defaults


def compute_attn_mask_pallas(mask_windows):
    """mask_windows: np.ndarray (nW, L) -> jnp.ndarray (nW, L, L) float32."""
    mask_windows = np.asarray(mask_windows, dtype=np.float32)
    nW, L = mask_windows.shape
    lane = nW * L  # window axis folded into lanes -> lane width is a multiple of 128

    # Broadcast operands, built once host-side (init-time, numpy scale):
    #   row_ids[i, n*L + j] = mask_windows[n, i]
    #   col_ids[0, n*L + j] = mask_windows[n, j]
    row_ids = np.repeat(np.ascontiguousarray(mask_windows.T), L, axis=1)  # (L, lane)
    col_ids = mask_windows.reshape(1, lane)                               # (1, lane)

    # Row tile: whole problem in one grid step when it fits VMEM (default config
    # is ~64 KiB); otherwise tile the query-row axis in multiples of 8 while
    # keeping the full lane width (valid (8,128)-aligned blocks, unmasked stores).
    per_row_bytes = lane * _F32_BYTES * 4  # double-buffered row-ids in + out blocks
    max_rows = max(8, _VMEM_BUDGET_BYTES // per_row_bytes)
    tr = L if L <= max_rows else (max_rows // 8) * 8
    grid = (pl.cdiv(L, tr),)

    packed = pl.pallas_call(
        _attn_mask_kernel,
        out_shape=jax.ShapeDtypeStruct((L, lane), jnp.float32),
        grid=grid,
        in_specs=[
            pl.BlockSpec((tr, lane), lambda i: (i, 0)),
            pl.BlockSpec((1, lane), lambda i: (0, 0)),
        ],
        out_specs=pl.BlockSpec((tr, lane), lambda i: (i, 0)),
        compiler_params=pltpu.CompilerParams(dimension_semantics=("parallel",)),
    )(jnp.asarray(row_ids), jnp.asarray(col_ids))

    # (L, nW*L) -> (nW, L, L); one init-time reshape+transpose on a tiny array.
    return packed.reshape(L, nW, L).transpose(1, 0, 2)


# ----------------------------- module wrapper -----------------------------

class SwinShiftedWindowAttnMaskPallas:
    def __init__(self, input_resolution=(16, 16), attn_splits=2):
        mask_windows = build_mask_windows_np(input_resolution, attn_splits)  # (nW, L)
        self._mask_windows_np = mask_windows
        self.attn_mask = compute_attn_mask_pallas(mask_windows)             # (nW, L, L)

    def __call__(self, x):
        # forward ignores x and returns the precomputed mask (like the torch module)
        return self.attn_mask


# ----------------------------- main -----------------------------

if __name__ == "__main__":
    key = jax.random.PRNGKey(0)
    # forward input (ignored by the module), NCHW like torch
    x = jax.random.normal(key, (2, 4, 16, 16), dtype=jnp.float32)

    module = SwinShiftedWindowAttnMaskPallas(input_resolution=(16, 16), attn_splits=2)
    out = jax.block_until_ready(module(x))

    # numpy reference for the pairwise-diff + masked_fill path
    mw = module._mask_windows_np                     # (nW, L)
    diff = mw[:, None, :] - mw[:, :, None]           # unsqueeze(1) - unsqueeze(2)
    ref = np.where(diff != 0, np.float32(-100.0), np.float32(0.0))

    assert out.shape == ref.shape, (out.shape, ref.shape)
    np.testing.assert_allclose(np.asarray(out), ref, rtol=0, atol=0)

    print("KERNEL_OK")
</pallas_src>

<mosaic_0001>
module attributes {stable_mosaic.version = 11 : i64} {
  func.func @_attn_mask_kernel(%arg0: i32, %arg1: memref<64x256xf32, #tpu.memory_space<vmem>>, %arg2: memref<1x256xf32, #tpu.memory_space<vmem>>, %arg3: memref<64x256xf32, #tpu.memory_space<vmem>>) attributes {dimension_semantics = [#tpu.dimension_semantics<parallel>], iteration_bounds = array<i64: 1>, scalar_prefetch = 0 : i64, scratch_operands = 0 : i64, tpu.core_type = #tpu.core_type<tc>, window_params = [{transform_indices = @transform_0, window_bounds = array<i64: 64, 256>}, {pipeline_mode = #tpu.pipeline_mode<synchronous>, transform_indices = @transform_1, window_bounds = array<i64: 1, 256>}, {transform_indices = @transform_2, window_bounds = array<i64: 64, 256>}]} {
    %c0 = arith.constant 0 : index
    %c0_0 = arith.constant 0 : index
    %0 = vector.load %arg1[%c0, %c0_0] : memref<64x256xf32, #tpu.memory_space<vmem>>, vector<64x256xf32>
    %c0_1 = arith.constant 0 : index
    %c0_2 = arith.constant 0 : index
    %1 = vector.load %arg2[%c0_1, %c0_2] : memref<1x256xf32, #tpu.memory_space<vmem>>, vector<1x256xf32>
    %2 = vector.broadcast %1 : vector<1x256xf32> to vector<64x256xf32>
    %3 = arith.cmpf one, %0, %2 : vector<64x256xf32>
    %cst = arith.constant -1.000000e+02 : f32
    %cst_3 = arith.constant 0.000000e+00 : f32
    %4 = vector.broadcast %cst : f32 to vector<64x256xf32>
    %5 = vector.broadcast %cst_3 : f32 to vector<64x256xf32>
    %6 = arith.select %3, %4, %5 : vector<64x256xi1>, vector<64x256xf32>
    %c0_4 = arith.constant 0 : index
    %c0_5 = arith.constant 0 : index
    %7 = vector.load %arg3[%c0_4, %c0_5] : memref<64x256xf32, #tpu.memory_space<vmem>>, vector<64x256xf32>
    tpu.vector_store %arg3[%c0_4, %c0_5], %6 {strides = array<i32>} : memref<64x256xf32, #tpu.memory_space<vmem>>, vector<64x256xf32>,
    return
  }
  func.func @transform_0(%arg0: i32) -> (i32, i32) {
    %c0_i32 = arith.constant 0 : i32
    %c0_i32_0 = arith.constant 0 : i32
    return %arg0, %c0_i32 : i32, i32
  }
  func.func @transform_1(%arg0: i32) -> (i32, i32) {
    %c0_i32 = arith.constant 0 : i32
    %c0_i32_0 = arith.constant 0 : i32
    %c0_i32_1 = arith.constant 0 : i32
    return %c0_i32, %c0_i32_0 : i32, i32
  }
  func.func @transform_2(%arg0: i32) -> (i32, i32) {
    %c0_i32 = arith.constant 0 : i32
    %c0_i32_0 = arith.constant 0 : i32
    return %arg0, %c0_i32 : i32, i32
  }
}

</mosaic_0001>

<llo_original>
// kernel: tpu_custom_call.1
$region0: #{tpu_custom_call.1}
  #allocation0 [shape = 'u32[]', space=smem, size = 0x4, offset = 0x4, fixed_abs, tag = 'smem constant byte address 0x4 - core index']
  #allocation1 [shape = 'u32[144,128]{1,0:T(1,128)}', space=vmem, size = 0x12000, scoped, tag = 'internal scratch']
  %s0 = inlined_call_operand.hbm [shape: f32[64,256], index: 0, kind: input, shape index: {}]
  %s1 = inlined_call_operand.vmem [shape: f32[1,256], index: 1, kind: input, shape index: {}]
  %s2 = inlined_call_operand.hbm [shape: f32[64,256], index: 2, kind: output, shape index: {}]
  %s3 = sld [smem:[#allocation0]]
  $region22: #{tpu_custom_call.1} parent=0
    _
  %s5 = ssub.s32 1, %s3
  %s6 = scalar_select 0, %s5, %s3
  $region1: #{tpu_custom_call.1} parent=0
    #allocation2 [shape = 'u8[65536]{0}', space=vmem, size = 0x10000, scoped, tag = 'input window, operand 0, single buffered']
    #allocation3 [shape = 's32[1]{0}', space=sflag, size = 0x4, scoped, tag = 'scoped memory for tpu_custom_call.1']
    #allocation4 [shape = 's32[1]{0}', space=sflag, size = 0x4, scoped, tag = 'scoped memory for tpu_custom_call.1']
    #allocation5 [shape = 'u8[65536]{0}', space=vmem, size = 0x10000, scoped, tag = 'output window, operand 0, single buffered']
    %7 = vsyncpa [#allocation3], 0
    %8 = vsyncpa [#allocation4], 0
    // Predicated region
    $region2: #{tpu_custom_call.1} parent=1 // pred_check
      _
    $region3: #{tpu_custom_call.1} parent=1 // pred_check_branch
      %10 = sbr.rel (0) target = $region5
    $region4: #{tpu_custom_call.1} parent=1 // pred_region
      %s12 = ssub.s32 2048, 2048
      %13 = vsyncadd [#allocation3], %s12
      %s14 = sshll.u32 [#allocation2], 4
      %s15 = int_to_ptr.vmem [resolvable:$true] %s14
      %20 = dma.hbm_to_vmem [thread:$0]  %s0, 2048, %s15, [#allocation3], 256, 256, 16
    $region5: #{tpu_custom_call.1} parent=1 // pred_fallthru
      _
    // Predicated region
    $region6: #{tpu_custom_call.1} parent=1 // pred_check
      _
    $region7: #{tpu_custom_call.1} parent=1 // pred_check_branch
      %22 = sbr.rel (0) target = $region9
    $region8: #{tpu_custom_call.1} parent=1 // pred_region
      _
    $region9: #{tpu_custom_call.1} parent=1 // pred_fallthru
      _
    // Predicated region
    $region10: #{tpu_custom_call.1} parent=1 // pred_check
      _
    $region11: #{tpu_custom_call.1} parent=1 // pred_check_branch
      %24 = sbr.rel (0) target = $region13
    $region12: #{tpu_custom_call.1} parent=1 // pred_region
      %25 = dma.done [#allocation3], 2048
    $region13: #{tpu_custom_call.1} parent=1 // pred_fallthru
      _
    %v26 = vld [vmem:[#allocation2] sm:$0xff]
    %v27 = vld [vmem:[#allocation2 + $0x8] sm:$0xff]
    %v28 = vld [vmem:[#allocation2 + $0x10] sm:$0xff]
    %v29 = vld [vmem:[#allocation2 + $0x18] sm:$0xff]
    %v30 = vld [vmem:[#allocation2 + $0x20] sm:$0xff]
    %v31 = vld [vmem:[#allocation2 + $0x28] sm:$0xff]
    %v32 = vld [vmem:[#allocation2 + $0x30] sm:$0xff]
    %v33 = vld [vmem:[#allocation2 + $0x38] sm:$0xff]
    %v34 = vld [vmem:[#allocation2 + $0x40] sm:$0xff]
    %v35 = vld [vmem:[#allocation2 + $0x48] sm:$0xff]
    %v36 = vld [vmem:[#allocation2 + $0x50] sm:$0xff]
    %v37 = vld [vmem:[#allocation2 + $0x58] sm:$0xff]
    %v38 = vld [vmem:[#allocation2 + $0x60] sm:$0xff]
    %v39 = vld [vmem:[#allocation2 + $0x68] sm:$0xff]
    %v40 = vld [vmem:[#allocation2 + $0x70] sm:$0xff]
    %v41 = vld [vmem:[#allocation2 + $0x78] sm:$0xff]
    %v42 = vld [vmem:[%s1] sm:$0x3]
    %v44 = vlaneseq
    %v45 = vshrl.u32 %v44, 7
    %v46 = vsub.s32 0, %v45
    %v47 = vrot.slane %v42, %v46
    %v48 = vlaneseq
    %v49 = vshrl.u32 %v48, 7
    %v50 = vsub.s32 1, %v49
    %v51 = vrot.slane %v42, %v50
    %vm54 = vcmp.ne.f32.partialorder %v26, %v47
    %vm55 = vcmp.ne.f32.partialorder %v27, %v51
    %vm56 = vcmp.ne.f32.partialorder %v28, %v47
    %vm57 = vcmp.ne.f32.partialorder %v29, %v51
    %vm58 = vcmp.ne.f32.partialorder %v30, %v47
    %vm59 = vcmp.ne.f32.partialorder %v31, %v51
    %vm60 = vcmp.ne.f32.partialorder %v32, %v47
    %vm61 = vcmp.ne.f32.partialorder %v33, %v51
    %vm62 = vcmp.ne.f32.partialorder %v34, %v47
    %vm63 = vcmp.ne.f32.partialorder %v35, %v51
    %vm64 = vcmp.ne.f32.partialorder %v36, %v47
    %vm65 = vcmp.ne.f32.partialorder %v37, %v51
    %vm66 = vcmp.ne.f32.partialorder %v38, %v47
    %vm67 = vcmp.ne.f32.partialorder %v39, %v51
    %vm68 = vcmp.ne.f32.partialorder %v40, %v47
    %vm69 = vcmp.ne.f32.partialorder %v41, %v51
    %v70 = vsel %vm54, -100.0, 0.0
    %v71 = vsel %vm55, -100.0, 0.0
    %v72 = vsel %vm56, -100.0, 0.0
    %v73 = vsel %vm57, -100.0, 0.0
    %v74 = vsel %vm58, -100.0, 0.0
    %v75 = vsel %vm59, -100.0, 0.0
    %v76 = vsel %vm60, -100.0, 0.0
    %v77 = vsel %vm61, -100.0, 0.0
    %v78 = vsel %vm62, -100.0, 0.0
    %v79 = vsel %vm63, -100.0, 0.0
    %v80 = vsel %vm64, -100.0, 0.0
    %v81 = vsel %vm65, -100.0, 0.0
    %v82 = vsel %vm66, -100.0, 0.0
    %v83 = vsel %vm67, -100.0, 0.0
    %v84 = vsel %vm68, -100.0, 0.0
    %v85 = vsel %vm69, -100.0, 0.0
    %86 = vst [vmem:[#allocation5] sm:$0xff] %v70
    %87 = vst [vmem:[#allocation5 + $0x8] sm:$0xff] %v71
    %88 = vst [vmem:[#allocation5 + $0x10] sm:$0xff] %v72
    %89 = vst [vmem:[#allocation5 + $0x18] sm:$0xff] %v73
    %90 = vst [vmem:[#allocation5 + $0x20] sm:$0xff] %v74
    %91 = vst [vmem:[#allocation5 + $0x28] sm:$0xff] %v75
    %92 = vst [vmem:[#allocation5 + $0x30] sm:$0xff] %v76
    %93 = vst [vmem:[#allocation5 + $0x38] sm:$0xff] %v77
    %94 = vst [vmem:[#allocation5 + $0x40] sm:$0xff] %v78
    %95 = vst [vmem:[#allocation5 + $0x48] sm:$0xff] %v79
    %96 = vst [vmem:[#allocation5 + $0x50] sm:$0xff] %v80
    %97 = vst [vmem:[#allocation5 + $0x58] sm:$0xff] %v81
    %98 = vst [vmem:[#allocation5 + $0x60] sm:$0xff] %v82
    %99 = vst [vmem:[#allocation5 + $0x68] sm:$0xff] %v83
    %100 = vst [vmem:[#allocation5 + $0x70] sm:$0xff] %v84
    %101 = vst [vmem:[#allocation5 + $0x78] sm:$0xff] %v85
    // Predicated region
    $region14: #{tpu_custom_call.1} parent=1 // pred_check
      _
    $region15: #{tpu_custom_call.1} parent=1 // pred_check_branch
      %103 = sbr.rel (0) target = $region17
    $region16: #{tpu_custom_call.1} parent=1 // pred_region
      %s105 = ssub.s32 2048, 2048
      %106 = vsyncadd [#allocation4], %s105
      %s107 = sshll.u32 [#allocation5], 4
      %s108 = int_to_ptr.vmem [resolvable:$true] %s107
      %113 = dma.vmem_to_hbm [thread:$0]  %s108, 2048, %s2, [#allocation4], 256, 256, 16
    $region17: #{tpu_custom_call.1} parent=1 // pred_fallthru
      _
    // Predicated region
    $region18: #{tpu_custom_call.1} parent=1 // pred_check
      _
    $region19: #{tpu_custom_call.1} parent=1 // pred_check_branch
      %115 = sbr.rel (0) target = $region21
    $region20: #{tpu_custom_call.1} parent=1 // pred_region
      %116 = dma.done [#allocation4], 2048
    $region21: #{tpu_custom_call.1} parent=1 // pred_fallthru
      _
    %117 = vsyncpa [#allocation3], 1
    %118 = vsyncpa [#allocation4], 1

</llo_original>
